<compile_context>
chip_gen: v5e
topology: v5e:2x2
jax: 0.10.0
libtpu: 0.0.40
codegen_flags: <defaults>
</compile_context>

<pallas_src>
import functools

import jax
import jax.numpy as jnp
from jax import lax
from jax.experimental import pallas as pl
from jax.experimental.pallas import tpu as pltpu


def _layernorm_kernel(x_ref, w_ref, b_ref, o_ref, *, eps):
    x = x_ref[...].astype(jnp.float32)                     # (tile_rows, H)
    # One pass over the tile: E[x] and E[x^2] are computed from the same f32
    # copy of x; no persistent (x - u) temporary is kept across statements.
    u = jnp.mean(x, axis=-1, keepdims=True)                # (tile_rows, 1)
    m2 = jnp.mean(x * x, axis=-1, keepdims=True)
    var = jnp.maximum(m2 - u * u, 0.0)                     # biased var, f32; clamp cancellation
    r = lax.rsqrt(var + eps)                               # EUP rsqrt: frees VPU slots
    # (x - u) * (w * r) + b : w*r broadcasts (1,H)*(tile,1) -> (tile,H)
    o_ref[...] = ((x - u) * (w_ref[...] * r) + b_ref[...]).astype(o_ref.dtype)


def _vmem_config():
    """Generation-aware VMEM pipeline budget and scoped-VMEM limit (bytes)."""
    phys = 64 << 20  # conservative fallback = v7x per-TensorCore VMEM
    try:
        info = pltpu.get_tpu_info()
        phys = int(getattr(info, "vmem_capacity_bytes", phys) or phys)
    except Exception:  # not on TPU / interpret mode: keep conservative default
        pass
    budget = (phys * 3) // 5        # ~60% for the double-buffered pipeline
    limit = (phys * 7) // 8         # ~87.5%: headroom for Mosaic's own scratch
    return budget, limit


def _choose_row_tile(n_rows, hidden, itemsize, pipeline_budget_bytes):
    """Row tile sized against VMEM + per-step HBM-traffic targets."""
    rows8 = ((n_rows + 7) // 8) * 8
    # Per tile-row VMEM footprint: double-buffered input + output tiles
    # (itemsize each) plus one f32 working copy used inside the body.
    vmem_per_row = hidden * (4 * itemsize + 4)
    tile = pipeline_budget_bytes // max(vmem_per_row, 1)
    # Target ~16 MiB of in+out HBM traffic per grid step: amortizes the fixed
    # ~0.35 us/step overhead to <1-2% even at v7x's 3.2 TB/s. No fixed row cap.
    hbm_per_row = 2 * hidden * itemsize
    tile = min(tile, (16 << 20) // max(hbm_per_row, 1))
    # Keep >= 4 grid steps once total traffic is big enough, so writeback and
    # compute of step i overlap the input DMA of step i+1.
    if rows8 * hbm_per_row >= (32 << 20):
        tile = min(tile, pl.cdiv(rows8, 4))
    tile = max(8, min((tile // 8) * 8, rows8))
    # v7x megacore: the 2 TensorCores split the single "parallel" grid axis;
    # prefer an even step count (up to ~10% tail imbalance otherwise). On
    # single-core chips this costs at most one extra ~0.35 us step.
    steps = pl.cdiv(n_rows, tile)
    if steps > 1 and steps % 2:
        t = max(8, ((pl.cdiv(n_rows, steps + 1) + 7) // 8) * 8)
        if pl.cdiv(n_rows, t) % 2 == 0:
            tile = t
    return tile


def layer_norm(x, weight, bias, eps=1e-12, *, row_tile=None):
    """x: (..., H). Returns same shape/dtype, LayerNorm over the last axis."""
    orig_shape = x.shape
    H = orig_shape[-1]
    x2 = x.reshape(-1, H)
    R = x2.shape[0]

    budget, vmem_limit = _vmem_config()
    if row_tile is None:
        row_tile = _choose_row_tile(R, H, x2.dtype.itemsize, budget)

    # Cast params to f32 once here; the constant-index BlockSpec keeps them
    # VMEM-resident across all grid steps.
    w2 = weight.reshape(1, H).astype(jnp.float32)
    b2 = bias.reshape(1, H).astype(jnp.float32)

    # Partial last block is masked by Pallas; every reduction is per-row
    # (axis=-1), so garbage in padded rows never reaches stored rows.
    grid = (pl.cdiv(R, row_tile),)

    out = pl.pallas_call(
        functools.partial(_layernorm_kernel, eps=float(eps)),
        out_shape=jax.ShapeDtypeStruct((R, H), x.dtype),
        grid_spec=pltpu.PrefetchScalarGridSpec(
            num_scalar_prefetch=0,
            grid=grid,
            in_specs=[
                # TODO(synk): optionally sweep pipeline_mode=pl.Buffered(3) on
                # this spec on v7x if a trace shows exposed DMA at step edges.
                pl.BlockSpec((row_tile, H), lambda i: (i, 0)),
                pl.BlockSpec((1, H), lambda i: (0, 0)),
                pl.BlockSpec((1, H), lambda i: (0, 0)),
            ],
            out_specs=pl.BlockSpec((row_tile, H), lambda i: (i, 0)),
        ),
        compiler_params=pltpu.CompilerParams(
            dimension_semantics=("parallel",),
            vmem_limit_bytes=int(vmem_limit),
        ),
    )(x2, w2, b2)

    return out.reshape(orig_shape)


if __name__ == "__main__":
    key = jax.random.PRNGKey(0)
    batch, seq, hidden = 2, 8, 32
    x = jax.random.normal(key, (batch, seq, hidden), dtype=jnp.float32)

    # Deterministic params matching nn.Parameter(torch.ones/zeros(hidden_size)).
    weight = jnp.ones((hidden,), jnp.float32)
    bias = jnp.zeros((hidden,), jnp.float32)

    out = layer_norm(x, weight, bias, eps=1e-12)
    out = jax.block_until_ready(out)

    # Reference check in plain JAX (same math as the PyTorch module).
    u = jnp.mean(x, axis=-1, keepdims=True)
    s = jnp.mean((x - u) ** 2, axis=-1, keepdims=True)
    ref = weight * ((x - u) / jnp.sqrt(s + 1e-12)) + bias
    assert out.shape == x.shape and out.dtype == x.dtype
    assert jnp.allclose(out, ref, atol=1e-5, rtol=1e-5)

    print("KERNEL_OK")
</pallas_src>

<mosaic_0001>
module attributes {stable_mosaic.version = 11 : i64} {
  func.func @_layernorm_kernel(%arg0: i32, %arg1: memref<16x32xf32, #tpu.memory_space<vmem>>, %arg2: memref<1x32xf32, #tpu.memory_space<vmem>>, %arg3: memref<1x32xf32, #tpu.memory_space<vmem>>, %arg4: memref<16x32xf32, #tpu.memory_space<vmem>>) attributes {dimension_semantics = [#tpu.dimension_semantics<parallel>], iteration_bounds = array<i64: 1>, scalar_prefetch = 0 : i64, scratch_operands = 0 : i64, tpu.core_type = #tpu.core_type<tc>, window_params = [{transform_indices = @transform_0, window_bounds = array<i64: 16, 32>}, {pipeline_mode = #tpu.pipeline_mode<synchronous>, transform_indices = @transform_1, window_bounds = array<i64: 1, 32>}, {pipeline_mode = #tpu.pipeline_mode<synchronous>, transform_indices = @transform_2, window_bounds = array<i64: 1, 32>}, {transform_indices = @transform_3, window_bounds = array<i64: 16, 32>}]} {
    %c0 = arith.constant 0 : index
    %c0_0 = arith.constant 0 : index
    %0 = vector.load %arg1[%c0, %c0_0] : memref<16x32xf32, #tpu.memory_space<vmem>>, vector<16x32xf32>
    %cst = arith.constant dense<0.000000e+00> : vector<16xf32>
    %1 = vector.multi_reduction <add>, %0, %cst [1] : vector<16x32xf32> to vector<16xf32>
    %2 = vector.shape_cast %1 : vector<16xf32> to vector<16x1xf32>
    %cst_1 = arith.constant 3.200000e+01 : f32
    %3 = vector.broadcast %cst_1 : f32 to vector<16x1xf32>
    %4 = arith.divf %2, %3 : vector<16x1xf32>
    %5 = arith.mulf %0, %0 : vector<16x32xf32>
    %cst_2 = arith.constant dense<0.000000e+00> : vector<16xf32>
    %6 = vector.multi_reduction <add>, %5, %cst_2 [1] : vector<16x32xf32> to vector<16xf32>
    %7 = vector.shape_cast %6 : vector<16xf32> to vector<16x1xf32>
    %cst_3 = arith.constant 3.200000e+01 : f32
    %8 = vector.broadcast %cst_3 : f32 to vector<16x1xf32>
    %9 = arith.divf %7, %8 : vector<16x1xf32>
    %10 = arith.mulf %4, %4 : vector<16x1xf32>
    %11 = arith.subf %9, %10 : vector<16x1xf32>
    %cst_4 = arith.constant 0.000000e+00 : f32
    %12 = vector.broadcast %cst_4 : f32 to vector<16x1xf32>
    %13 = arith.maximumf %11, %12 : vector<16x1xf32>
    %cst_5 = arith.constant 9.99999996E-13 : f32
    %14 = vector.broadcast %cst_5 : f32 to vector<16x1xf32>
    %15 = arith.addf %13, %14 : vector<16x1xf32>
    %16 = math.rsqrt %15 : vector<16x1xf32>
    %17 = vector.broadcast %4 : vector<16x1xf32> to vector<16x32xf32>
    %18 = arith.subf %0, %17 : vector<16x32xf32>
    %c0_6 = arith.constant 0 : index
    %c0_7 = arith.constant 0 : index
    %19 = vector.load %arg2[%c0_6, %c0_7] : memref<1x32xf32, #tpu.memory_space<vmem>>, vector<1x32xf32>
    %20 = vector.broadcast %19 : vector<1x32xf32> to vector<16x32xf32>
    %21 = vector.broadcast %16 : vector<16x1xf32> to vector<16x32xf32>
    %22 = arith.mulf %20, %21 : vector<16x32xf32>
    %23 = arith.mulf %18, %22 : vector<16x32xf32>
    %c0_8 = arith.constant 0 : index
    %c0_9 = arith.constant 0 : index
    %24 = vector.load %arg3[%c0_8, %c0_9] : memref<1x32xf32, #tpu.memory_space<vmem>>, vector<1x32xf32>
    %25 = vector.broadcast %24 : vector<1x32xf32> to vector<16x32xf32>
    %26 = arith.addf %23, %25 : vector<16x32xf32>
    %c0_10 = arith.constant 0 : index
    %c0_11 = arith.constant 0 : index
    %27 = vector.load %arg4[%c0_10, %c0_11] : memref<16x32xf32, #tpu.memory_space<vmem>>, vector<16x32xf32>
    tpu.vector_store %arg4[%c0_10, %c0_11], %26 {strides = array<i32>} : memref<16x32xf32, #tpu.memory_space<vmem>>, vector<16x32xf32>,
    return
  }
  func.func @transform_0(%arg0: i32) -> (i32, i32) {
    %c0_i32 = arith.constant 0 : i32
    %c0_i32_0 = arith.constant 0 : i32
    return %arg0, %c0_i32 : i32, i32
  }
  func.func @transform_1(%arg0: i32) -> (i32, i32) {
    %c0_i32 = arith.constant 0 : i32
    %c0_i32_0 = arith.constant 0 : i32
    %c0_i32_1 = arith.constant 0 : i32
    return %c0_i32, %c0_i32_0 : i32, i32
  }
  func.func @transform_2(%arg0: i32) -> (i32, i32) {
    %c0_i32 = arith.constant 0 : i32
    %c0_i32_0 = arith.constant 0 : i32
    %c0_i32_1 = arith.constant 0 : i32
    return %c0_i32, %c0_i32_0 : i32, i32
  }
  func.func @transform_3(%arg0: i32) -> (i32, i32) {
    %c0_i32 = arith.constant 0 : i32
    %c0_i32_0 = arith.constant 0 : i32
    return %arg0, %c0_i32 : i32, i32
  }
}

</mosaic_0001>

<llo_original>
// kernel: tpu_custom_call.1
$region0: #{tpu_custom_call.1}
  #allocation0 [shape = 'u32[]', space=smem, size = 0x4, offset = 0x4, fixed_abs, tag = 'smem constant byte address 0x4 - core index']
  #allocation1 [shape = 'u32[72,128]{1,0:T(1,128)}', space=vmem, size = 0x9000, scoped, tag = 'internal scratch']
  %s0 = inlined_call_operand.hbm [shape: f32[16,32], index: 0, kind: input, shape index: {}]
  %s1 = inlined_call_operand.hbm [shape: f32[1,32], index: 1, kind: input, shape index: {}]
  %s2 = inlined_call_operand.vmem [shape: f32[1,32], index: 2, kind: input, shape index: {}]
  %s3 = inlined_call_operand.hbm [shape: f32[16,32], index: 3, kind: output, shape index: {}]
  %s4 = sld [smem:[#allocation0]]
  $region30: #{tpu_custom_call.1} parent=0
    _
  %s6 = ssub.s32 1, %s4
  %s7 = scalar_select 0, %s6, %s4
  $region1: #{tpu_custom_call.1} parent=0
    #allocation2 [shape = 'u8[8192]{0}', space=vmem, size = 0x2000, scoped, tag = 'input window, operand 0, single buffered']
    #allocation3 [shape = 's32[1]{0}', space=sflag, size = 0x4, scoped, tag = 'scoped memory for tpu_custom_call.1']
    #allocation4 [shape = 's32[1]{0}', space=sflag, size = 0x4, scoped, tag = 'scoped memory for tpu_custom_call.1']
    #allocation5 [shape = 'u8[512]{0}', space=vmem, size = 0x400, scoped, tag = 'input window, operand 1, single buffered']
    #allocation6 [shape = 's32[1]{0}', space=sflag, size = 0x4, scoped, tag = 'scoped memory for tpu_custom_call.1']
    #allocation7 [shape = 'u8[8192]{0}', space=vmem, size = 0x2000, scoped, tag = 'output window, operand 0, single buffered']
    %8 = vsyncpa [#allocation3], 0
    %9 = vsyncpa [#allocation6], 0
    %10 = vsyncpa [#allocation4], 0
    // Predicated region
    $region2: #{tpu_custom_call.1} parent=1 // pred_check
      _
    $region3: #{tpu_custom_call.1} parent=1 // pred_check_branch
      %12 = sbr.rel (0) target = $region5
    $region4: #{tpu_custom_call.1} parent=1 // pred_region
      %14 = vsyncadd [#allocation3], 0
      %s15 = sshll.u32 %s0, 4
      %s16 = int_to_ptr.hbm [resolvable:$true] %s15
      %s17 = sshll.u32 [#allocation2], 4
      %s18 = int_to_ptr.vmem [resolvable:$true] %s17
      %23 = dma.hbm_to_vmem [thread:$0]  %s16, 256, %s18, [#allocation3], 128, 128, 8
    $region5: #{tpu_custom_call.1} parent=1 // pred_fallthru
      _
    // Predicated region
    $region6: #{tpu_custom_call.1} parent=1 // pred_check
      _
    $region7: #{tpu_custom_call.1} parent=1 // pred_check_branch
      %25 = sbr.rel (0) target = $region9
    $region8: #{tpu_custom_call.1} parent=1 // pred_region
      %27 = vsyncadd [#allocation6], 0
      %s29 = sshll.u32 %s1, 4
      %s30 = int_to_ptr.hbm [resolvable:$true] %s29
      %s31 = sshll.u32 [#allocation5], 4
      %s32 = int_to_ptr.vmem [resolvable:$true] %s31
      %34 = dma.hbm_to_vmem [thread:$0]  %s30, 16, %s32, [#allocation6]
    $region9: #{tpu_custom_call.1} parent=1 // pred_fallthru
      _
    // Predicated region
    $region10: #{tpu_custom_call.1} parent=1 // pred_check
      _
    $region11: #{tpu_custom_call.1} parent=1 // pred_check_branch
      %36 = sbr.rel (0) target = $region13
    $region12: #{tpu_custom_call.1} parent=1 // pred_region
      _
    $region13: #{tpu_custom_call.1} parent=1 // pred_fallthru
      _
    // Predicated region
    $region14: #{tpu_custom_call.1} parent=1 // pred_check
      _
    $region15: #{tpu_custom_call.1} parent=1 // pred_check_branch
      %38 = sbr.rel (0) target = $region17
    $region16: #{tpu_custom_call.1} parent=1 // pred_region
      %40 = dma.done [#allocation3], 256
    $region17: #{tpu_custom_call.1} parent=1 // pred_fallthru
      _
    // Predicated region
    $region18: #{tpu_custom_call.1} parent=1 // pred_check
      _
    $region19: #{tpu_custom_call.1} parent=1 // pred_check_branch
      %42 = sbr.rel (0) target = $region21
    $region20: #{tpu_custom_call.1} parent=1 // pred_region
      %44 = dma.done [#allocation6], 16
    $region21: #{tpu_custom_call.1} parent=1 // pred_fallthru
      _
    %v45 = vld [vmem:[#allocation2] sm:$0xff]
    %v46 = vld [vmem:[#allocation2 + $0x8] sm:$0xff]
    %vm47 = vcmask 261120
    %v48 = vsel %vm47, %v45, 0.0
    %49 = vadd.xlane.f32.xlu0 %v48
    %v50 = vpop.xlane.xlu0 %49
    %v51 = vsel %vm47, %v46, 0.0
    %52 = vadd.xlane.f32.xlu0 %v51
    %v53 = vpop.xlane.xlu0 %52
    %v54 = vrcp.pop 32.0
    %v55 = vmul.f32 32.0, %v54
    %v56 = vsub.f32 1.0, %v55
    %v57 = vmul.f32 %v54, %v56
    %v58 = vadd.f32 %v54, %v57
    %vm59 = vweird.f32 %v54
    %v60 = vsel %vm59, %v54, %v58
    %v61 = vmul.f32 %v50, %v60
    %v62 = vmul.f32 %v53, %v60
    %v63 = vmul.f32 %v45, %v45
    %v64 = vmul.f32 %v46, %v46
    %v65 = vsel %vm47, %v63, 0.0
    %66 = vadd.xlane.f32.xlu0 %v65
    %v67 = vpop.xlane.xlu0 %66
    %v68 = vsel %vm47, %v64, 0.0
    %69 = vadd.xlane.f32.xlu0 %v68
    %v70 = vpop.xlane.xlu0 %69
    %v71 = vmul.f32 %v67, %v60
    %v72 = vmul.f32 %v70, %v60
    %v73 = vmul.f32 %v61, %v61
    %v74 = vmul.f32 %v62, %v62
    %v75 = vsub.f32 %v71, %v73
    %v76 = vsub.f32 %v72, %v74
    %v77 = vmax.f32 %v75, 0.0
    %v78 = vmax.f32 %v76, 0.0
    %v79 = vadd.f32 %v77, 1e-12
    %v80 = vadd.f32 %v78, 1e-12
    %v81 = vrsqrt.pop %v79
    %v82 = vmul.f32 %v81, %v79
    %v83 = vmul.f32 %v82, %v81
    %v84 = vmul.f32 0.5, %v83
    %v85 = vsub.f32 1.5, %v84
    %v86 = vmul.f32 %v81, %v85
    %vm87 = vweird.f32 %v79
    %vm88 = vweird.f32 %v81
    %vm89 = vmor %vm87, %vm88
    %v90 = vsel %vm89, %v81, %v86
    %v91 = vrsqrt.pop %v80
    %v92 = vmul.f32 %v91, %v80
    %v93 = vmul.f32 %v92, %v91
    %v94 = vmul.f32 0.5, %v93
    %v95 = vsub.f32 1.5, %v94
    %v96 = vmul.f32 %v91, %v95
    %vm97 = vweird.f32 %v80
    %vm98 = vweird.f32 %v91
    %vm99 = vmor %vm97, %vm98
    %v100 = vsel %vm99, %v91, %v96
    %v101 = vsub.f32 %v45, %v61
    %v102 = vsub.f32 %v46, %v62
    %v103 = vld [vmem:[#allocation5] sm:$0x1]
    %v105 = vperm.slane %v103, 0
    %v107 = vmul.f32 %v105, %v90
    %v108 = vmul.f32 %v105, %v100
    %v109 = vmul.f32 %v101, %v107
    %v110 = vmul.f32 %v102, %v108
    %v111 = vld [vmem:[%s2] sm:$0x1]
    %v113 = vperm.slane %v111, 0
    %v115 = vadd.f32 %v109, %v113
    %v116 = vadd.f32 %v110, %v113
    %117 = vst.msk [vmem:[#allocation7] sm:$0xff] %vm47, %v115
    %118 = vst.msk [vmem:[#allocation7 + $0x8] sm:$0xff] %vm47, %v116
    // Predicated region
    $region22: #{tpu_custom_call.1} parent=1 // pred_check
      _
    $region23: #{tpu_custom_call.1} parent=1 // pred_check_branch
      %120 = sbr.rel (0) target = $region25
    $region24: #{tpu_custom_call.1} parent=1 // pred_region
      %122 = vsyncadd [#allocation4], 0
      %s123 = sshll.u32 [#allocation7], 4
      %s124 = int_to_ptr.vmem [resolvable:$true] %s123
      %s125 = sshll.u32 %s3, 4
      %s126 = int_to_ptr.hbm [resolvable:$true] %s125
      %131 = dma.vmem_to_hbm [thread:$0]  %s124, 256, %s126, [#allocation4], 128, 128, 8
    $region25: #{tpu_custom_call.1} parent=1 // pred_fallthru
      _
    // Predicated region
    $region26: #{tpu_custom_call.1} parent=1 // pred_check
      _
    $region27: #{tpu_custom_call.1} parent=1 // pred_check_branch
      %133 = sbr.rel (0) target = $region29
    $region28: #{tpu_custom_call.1} parent=1 // pred_region
      %135 = dma.done [#allocation4], 256
    $region29: #{tpu_custom_call.1} parent=1 // pred_fallthru
      _
    %136 = vsyncpa [#allocation3], 1
    %137 = vsyncpa [#allocation6], 1
    %138 = vsyncpa [#allocation4], 1

</llo_original>
